<compile_context>
chip_gen: v7x
topology: tpu7x:2x2x1
jax: 0.10.0
libtpu: 0.0.40
codegen_flags: <defaults>
</compile_context>

<pallas_src>
import jax
import jax.numpy as jnp
from jax.experimental import pallas as pl
from jax.experimental.pallas import tpu as pltpu


def se_kernel(x_ref, w1t_ref, w2t_ref, o_ref):
    # x_ref block: (TB, C, HW) -- NCHW flattened, spatial (HW) on the lane axis.
    hw = x_ref.shape[-1]

    # Squeeze: global average pool over the spatial (lane) axis, in f32.
    # Only the (TB, C) pooled value stays live across the FC section.
    pooled = jnp.sum(x_ref[...].astype(jnp.float32), axis=-1) * (1.0 / hw)   # (TB, C)

    # Excitation: fc1 (no bias) + ReLU, fc2 (no bias) + sigmoid.  Tiny matmuls,
    # fully hidden under the block DMA -- no effort spent here on purpose.
    h = jnp.dot(pooled, w1t_ref[...].astype(jnp.float32),
                preferred_element_type=jnp.float32)                          # (TB, Cr)
    h = jnp.maximum(h, 0.0)
    s = jnp.dot(h, w2t_ref[...].astype(jnp.float32),
                preferred_element_type=jnp.float32)                          # (TB, C)
    s = jax.nn.sigmoid(s)

    # Scale: re-read the tile, multiply in f32 (lane-broadcast of s over HW),
    # single downcast at the store.
    o_ref[...] = (x_ref[...].astype(jnp.float32) * s[:, :, None]).astype(o_ref.dtype)


def _cdiv(a, b):
    return -(-a // b)


def _chip_plan():
    """Return (two_tensorcores, block_budget_bytes, vmem_limit_cap_bytes)."""
    kind = ""
    try:
        kind = jax.devices()[0].device_kind.lower()
    except Exception:
        pass
    vmem = 0
    try:
        vmem = int(pltpu.get_tpu_info().vmem_capacity_bytes)
    except Exception:
        pass
    big_vmem = vmem >= (96 << 20) or any(g in kind for g in ("v5", "v6"))
    v7_like = ("v7" in kind) or not big_vmem
    if v7_like:
        # 64 MiB VMEM per TC, 2 TCs/chip: ~7 MiB blocks, leave compiler headroom.
        return True, 7 << 20, 52 << 20
    # v5e / v6e: 128 MiB VMEM, single TC: big blocks, lifted scoped-VMEM limit.
    return False, 14 << 20, 100 << 20


def _plan_tiling(batch, per_elem_bytes, budget_bytes, two_tensorcores):
    """Pick (batch_tile, padded_batch).

    Largest tile that fits the per-block VMEM budget; on 2-TC chips keep the
    step count even so both cores get balanced work; prefer an exact divisor
    of `batch` (no padding pass) when one exists that is >= half the ideal
    tile, otherwise pad the batch rather than collapsing the tile size.
    """
    tb = max(1, min(batch, budget_bytes // max(per_elem_bytes, 1)))
    steps = _cdiv(batch, tb)
    if two_tensorcores and batch >= 2:
        if steps == 1:
            steps = 2
        elif steps % 2:
            steps += 1
    tb = _cdiv(batch, steps)
    for d in range(tb, 0, -1):
        if 2 * d < tb:
            break
        if batch % d:
            continue
        if two_tensorcores and batch >= 2 and (batch // d) % 2:
            continue
        tb = d
        break
    padded = _cdiv(batch, tb) * tb
    return tb, padded


def se_layer(x, w1, w2):
    """x: (B, C, H, W) NCHW, w1: (C//r, C), w2: (C, C//r) -> (B, C, H, W)."""
    B, C, H, W = x.shape
    HW = H * W
    Cr = w1.shape[0]
    dtype = x.dtype
    itemsize = jnp.dtype(dtype).itemsize

    # NCHW consumed directly: (B, C, HW) is a free (contiguous) reshape, so the
    # kernel's 2 HBM passes are the only HBM traffic (no layout transposes).
    x_r = x.reshape(B, C, HW)
    w1t = jnp.transpose(w1)   # (C, Cr) -- tiny
    w2t = jnp.transpose(w2)   # (Cr, C) -- tiny

    two_tc, budget, vmem_cap = _chip_plan()
    per_elem = C * HW * itemsize
    tb, padded_b = _plan_tiling(B, per_elem, budget, two_tc)
    if padded_b != B:
        x_r = jnp.pad(x_r, ((0, padded_b - B), (0, 0), (0, 0)))

    grid = (padded_b // tb,)
    block_bytes = tb * per_elem
    w_bytes = (w1t.size + w2t.size) * jnp.dtype(w1.dtype).itemsize
    # 2x double-buffered input + 2x double-buffered output + weights + headroom.
    vmem_limit = int(min(vmem_cap, 4 * block_bytes + 4 * w_bytes + (4 << 20)))

    cost = pl.CostEstimate(
        flops=2 * padded_b * C * HW + 4 * padded_b * C * Cr,
        transcendentals=padded_b * C,
        bytes_accessed=2 * padded_b * C * HW * itemsize + w_bytes,
    )

    out_r = pl.pallas_call(
        se_kernel,
        out_shape=jax.ShapeDtypeStruct((padded_b, C, HW), dtype),
        grid_spec=pltpu.PrefetchScalarGridSpec(
            num_scalar_prefetch=0,
            grid=grid,
            in_specs=[
                pl.BlockSpec((tb, C, HW), lambda b: (b, 0, 0)),
                pl.BlockSpec((C, Cr), lambda b: (0, 0)),
                pl.BlockSpec((Cr, C), lambda b: (0, 0)),
            ],
            out_specs=pl.BlockSpec((tb, C, HW), lambda b: (b, 0, 0)),
        ),
        compiler_params=pltpu.CompilerParams(
            dimension_semantics=("parallel",),
            vmem_limit_bytes=vmem_limit,
        ),
        cost_estimate=cost,
    )(x_r, w1t, w2t)

    return out_r[:B].reshape(B, C, H, W)


def se_layer_ref(x, w1, w2):
    """Pure-JAX reference matching the PyTorch forward exactly."""
    y = jnp.mean(x.astype(jnp.float32), axis=(2, 3))            # (B, C)
    y = jnp.maximum(y @ w1.T, 0.0)                              # (B, C//r)
    y = jax.nn.sigmoid(y @ w2.T)                                # (B, C)
    return (x.astype(jnp.float32) * y[:, :, None, None]).astype(x.dtype)


if __name__ == "__main__":
    # Representative SE shapes: channel=128, reduction=16 -> hidden=8; HW=256
    # (a multiple of 128 -> lane-dense stores).
    B, C, H, W = 4, 128, 16, 16
    reduction = 16
    Cr = C // reduction

    key = jax.random.PRNGKey(0)
    kx, k1, k2 = jax.random.split(key, 3)
    x = jax.random.normal(kx, (B, C, H, W), dtype=jnp.float32)
    # Deterministic synthetic weights (PyTorch Linear layout: (out, in)).
    w1 = jax.random.normal(k1, (Cr, C), dtype=jnp.float32) * 0.1
    w2 = jax.random.normal(k2, (C, Cr), dtype=jnp.float32) * 0.1

    out = se_layer(x, w1, w2)
    out = jax.block_until_ready(out)

    ref = se_layer_ref(x, w1, w2)
    assert out.shape == (B, C, H, W)
    err = float(jnp.max(jnp.abs(out - ref)))
    assert err < 1e-4, err

    print("KERNEL_OK")
</pallas_src>

<mosaic_0001>
module attributes {stable_mosaic.version = 11 : i64} {
  func.func @se_kernel(%arg0: i32, %arg1: memref<2x128x256xf32, #tpu.memory_space<vmem>>, %arg2: memref<128x8xf32, #tpu.memory_space<vmem>>, %arg3: memref<8x128xf32, #tpu.memory_space<vmem>>, %arg4: memref<2x128x256xf32, #tpu.memory_space<vmem>>) attributes {dimension_semantics = [#tpu.dimension_semantics<parallel>], iteration_bounds = array<i64: 2>, scalar_prefetch = 0 : i64, scratch_operands = 0 : i64, tpu.core_type = #tpu.core_type<tc>, window_params = [{transform_indices = @transform_0, window_bounds = array<i64: 2, 128, 256>}, {pipeline_mode = #tpu.pipeline_mode<synchronous>, transform_indices = @transform_1, window_bounds = array<i64: 128, 8>}, {pipeline_mode = #tpu.pipeline_mode<synchronous>, transform_indices = @transform_2, window_bounds = array<i64: 8, 128>}, {transform_indices = @transform_3, window_bounds = array<i64: 2, 128, 256>}]} {
    %c0 = arith.constant 0 : index
    %c0_0 = arith.constant 0 : index
    %c0_1 = arith.constant 0 : index
    %0 = vector.load %arg1[%c0, %c0_0, %c0_1] : memref<2x128x256xf32, #tpu.memory_space<vmem>>, vector<2x128x256xf32>
    %cst = arith.constant dense<0.000000e+00> : vector<2x128xf32>
    %1 = vector.multi_reduction <add>, %0, %cst [2] : vector<2x128x256xf32> to vector<2x128xf32>
    %cst_2 = arith.constant 3.906250e-03 : f32
    %2 = vector.broadcast %cst_2 : f32 to vector<2x128xf32>
    %3 = arith.mulf %1, %2 : vector<2x128xf32>
    %c0_3 = arith.constant 0 : index
    %c0_4 = arith.constant 0 : index
    %4 = vector.load %arg2[%c0_3, %c0_4] : memref<128x8xf32, #tpu.memory_space<vmem>>, vector<128x8xf32>
    %cst_5 = arith.constant dense<0.000000e+00> : vector<2x8xf32>
    %5 = tpu.matmul %3, %4, %cst_5 {dimension_numbers = #tpu.dot_dimension_numbers<[1], [0], [0], [1], [0, 0, 1, 1], [], []>} : vector<2x128xf32>, vector<128x8xf32>, vector<2x8xf32> -> vector<2x8xf32>
    %cst_6 = arith.constant 0.000000e+00 : f32
    %6 = vector.broadcast %cst_6 : f32 to vector<2x8xf32>
    %7 = arith.maximumf %5, %6 : vector<2x8xf32>
    %c0_7 = arith.constant 0 : index
    %c0_8 = arith.constant 0 : index
    %8 = vector.load %arg3[%c0_7, %c0_8] : memref<8x128xf32, #tpu.memory_space<vmem>>, vector<8x128xf32>
    %cst_9 = arith.constant dense<0.000000e+00> : vector<2x128xf32>
    %9 = tpu.matmul %7, %8, %cst_9 {dimension_numbers = #tpu.dot_dimension_numbers<[1], [0], [0], [1], [0, 0, 1, 1], [], []>} : vector<2x8xf32>, vector<8x128xf32>, vector<2x128xf32> -> vector<2x128xf32>
    %10 = arith.negf %9 : vector<2x128xf32>
    %11 = math.exp %10 : vector<2x128xf32>
    %cst_10 = arith.constant 1.000000e+00 : f32
    %12 = vector.broadcast %cst_10 : f32 to vector<2x128xf32>
    %13 = arith.addf %12, %11 : vector<2x128xf32>
    %14 = arith.divf %12, %13 : vector<2x128xf32>
    %c0_11 = arith.constant 0 : index
    %c0_12 = arith.constant 0 : index
    %c0_13 = arith.constant 0 : index
    %15 = vector.load %arg1[%c0_11, %c0_12, %c0_13] : memref<2x128x256xf32, #tpu.memory_space<vmem>>, vector<2x128x256xf32>
    %16 = vector.shape_cast %14 : vector<2x128xf32> to vector<2x128x1xf32>
    %17 = vector.broadcast %16 : vector<2x128x1xf32> to vector<2x128x256xf32>
    %18 = arith.mulf %15, %17 : vector<2x128x256xf32>
    %c0_14 = arith.constant 0 : index
    %c0_15 = arith.constant 0 : index
    %c0_16 = arith.constant 0 : index
    %19 = vector.load %arg4[%c0_14, %c0_15, %c0_16] : memref<2x128x256xf32, #tpu.memory_space<vmem>>, vector<2x128x256xf32>
    tpu.vector_store %arg4[%c0_14, %c0_15, %c0_16], %18 {strides = array<i32>} : memref<2x128x256xf32, #tpu.memory_space<vmem>>, vector<2x128x256xf32>,
    return
  }
  func.func @transform_0(%arg0: i32) -> (i32, i32, i32) {
    %c0_i32 = arith.constant 0 : i32
    %c0_i32_0 = arith.constant 0 : i32
    %c0_i32_1 = arith.constant 0 : i32
    return %arg0, %c0_i32, %c0_i32_0 : i32, i32, i32
  }
  func.func @transform_1(%arg0: i32) -> (i32, i32) {
    %c0_i32 = arith.constant 0 : i32
    %c0_i32_0 = arith.constant 0 : i32
    %c0_i32_1 = arith.constant 0 : i32
    return %c0_i32, %c0_i32_0 : i32, i32
  }
  func.func @transform_2(%arg0: i32) -> (i32, i32) {
    %c0_i32 = arith.constant 0 : i32
    %c0_i32_0 = arith.constant 0 : i32
    %c0_i32_1 = arith.constant 0 : i32
    return %c0_i32, %c0_i32_0 : i32, i32
  }
  func.func @transform_3(%arg0: i32) -> (i32, i32, i32) {
    %c0_i32 = arith.constant 0 : i32
    %c0_i32_0 = arith.constant 0 : i32
    %c0_i32_1 = arith.constant 0 : i32
    return %arg0, %c0_i32, %c0_i32_0 : i32, i32, i32
  }
}

</mosaic_0001>

<llo_original>
// kernel: tpu_custom_call.1
$region0: #{tpu_custom_call.1}
  #allocation0 [shape = 'u32[]', space=smem, size = 0x4, offset = 0x4, fixed_abs, tag = 'smem constant byte address 0x4 - core index']
  #allocation1 [shape = 'u32[144,128]{1,0:T(1,128)}', space=vmem, size = 0x12000, scoped, tag = 'internal scratch']
  %s0 = inlined_call_operand.hbm [shape: f32[4,128,256], index: 0, kind: input, shape index: {}]
  %s1 = inlined_call_operand.vmem [shape: f32[128,8], index: 1, kind: input, shape index: {}]
  %s2 = inlined_call_operand.vmem [shape: f32[8,128], index: 2, kind: input, shape index: {}]
  %s3 = inlined_call_operand.hbm [shape: f32[4,128,256], index: 3, kind: output, shape index: {}]
  %s4 = sld [smem:[#allocation0]]
  $region49: #{tpu_custom_call.1} parent=0
    _
  %s6 = ssub.s32 1, %s4
  %s7 = scalar_select 0, %s6, %s4
  $region1: #{tpu_custom_call.1} parent=0
    #allocation2 [shape = 'u8[524288]{0}', space=vmem, size = 0x80000, scoped, tag = 'input window, operand 0']
    #allocation3 [shape = 's32[2]{0}', space=sflag, size = 0x8, scoped, tag = 'scoped memory for tpu_custom_call.1']
    #allocation4 [shape = 's32[2]{0}', space=sflag, size = 0x8, scoped, tag = 'scoped memory for tpu_custom_call.1']
    #allocation5 [shape = 'u8[524288]{0}', space=vmem, size = 0x80000, scoped, tag = 'output window, operand 0']
    %8 = vsyncpa [#allocation3], 0
    %s9 = scalar_lea.sflag [#allocation3], 1
    %10 = vsyncpa %s9, 0
    %11 = vsyncpa [#allocation4], 0
    %s12 = scalar_lea.sflag [#allocation4], 1
    %13 = vsyncpa %s12, 0
    loop: start=0, step=1, limit=4
    $region2: #{tpu_custom_call.1} parent=1 // loop_pre_header
      _
    $region3: #{tpu_custom_call.1} parent=1 // loop_header
      %s15 = sphi 0, %s19
      %p16 = scmp.ge.s32.totalorder %s15, 4
      %s25 = sphi 0, %s27
      %s28 = sphi 0, %s25
      %s29 = sphi 0, %s28
      %s45 = sphi 0, %s29
      %s49 = sphi 0, %s49
      %s51 = sphi 0, %s49
      %s52 = sphi 0, %s51
      %s66 = sphi 0, %s52
      %s70 = sphi 0, %s70
      %s72 = sphi 0, %s70
      %s73 = sphi 0, %s72
      %s87 = sphi 0, %s73
      %s93 = sphi 0, %s95
      %s96 = sphi 0, %s93
      %s97 = sphi 0, %s96
      %s113 = sphi 0, %s97
    $region4: #{tpu_custom_call.1} parent=1 // loop_header_branch
      %18 = sbr.rel (%p16) target = $region8
    $region5: #{tpu_custom_call.1} parent=1 // loop_body
      %s20 = ssub.s32 %s15, 1
      %s21 = ssub.s32 %s15, 2
      %s22 = sadd.s32 %s15, 1
      %s23 = ssub.s32 %s15, %s22
      %p24 = scmp.eq.s32.totalorder %s23, 0
      %s26 = sadd.s32 %s25, 1
      %s27 = scalar_select %p24, %s25, %s26
      %p30 = pneg %p24
      %p31 = scmp.eq.s32.totalorder %s15, 1
      %p32 = por %p30, %p31
      %p33 = scmp.ne.s32.totalorder %s25, %s28
      %p34 = scmp.eq.s32.totalorder %s15, 0
      %p35 = por %p33, %p34
      %p36 = scmp.ne.s32.totalorder %s25, %s28
      %p37 = scmp.eq.s32.totalorder %s20, 1
      %p38 = por %p36, %p37
      %p39 = scmp.ne.s32.totalorder %s28, %s29
      %p40 = scmp.eq.s32.totalorder %s20, 0
      %p41 = por %p39, %p40
      %p42 = scmp.ne.s32.totalorder %s28, %s29
      %p43 = scmp.eq.s32.totalorder %s21, 1
      %p44 = por %p42, %p43
      %p46 = scmp.ne.s32.totalorder %s29, %s45
      %p47 = scmp.eq.s32.totalorder %s21, 0
      %p48 = por %p46, %p47
      %s50 = sadd.s32 %s49, 1
      %p53 = scmp.eq.s32.totalorder %s15, 1
      %p54 = scmp.ne.s32.totalorder %s49, %s51
      %p55 = scmp.eq.s32.totalorder %s15, 0
      %p56 = por %p54, %p55
      %p57 = scmp.ne.s32.totalorder %s49, %s51
      %p58 = scmp.eq.s32.totalorder %s20, 1
      %p59 = por %p57, %p58
      %p60 = scmp.ne.s32.totalorder %s51, %s52
      %p61 = scmp.eq.s32.totalorder %s20, 0
      %p62 = por %p60, %p61
      %p63 = scmp.ne.s32.totalorder %s51, %s52
      %p64 = scmp.eq.s32.totalorder %s21, 1
      %p65 = por %p63, %p64
      %p67 = scmp.ne.s32.totalorder %s52, %s66
      %p68 = scmp.eq.s32.totalorder %s21, 0
      %p69 = por %p67, %p68
      %s71 = sadd.s32 %s70, 1
      %p74 = scmp.eq.s32.totalorder %s15, 1
      %p75 = scmp.ne.s32.totalorder %s70, %s72
      %p76 = scmp.eq.s32.totalorder %s15, 0
      %p77 = por %p75, %p76
      %p78 = scmp.ne.s32.totalorder %s70, %s72
      %p79 = scmp.eq.s32.totalorder %s20, 1
      %p80 = por %p78, %p79
      %p81 = scmp.ne.s32.totalorder %s72, %s73
      %p82 = scmp.eq.s32.totalorder %s20, 0
      %p83 = por %p81, %p82
      %p84 = scmp.ne.s32.totalorder %s72, %s73
      %p85 = scmp.eq.s32.totalorder %s21, 1
      %p86 = por %p84, %p85
      %p88 = scmp.ne.s32.totalorder %s73, %s87
      %p89 = scmp.eq.s32.totalorder %s21, 0
      %p90 = por %p88, %p89
      %s91 = ssub.s32 %s15, %s22
      %p92 = scmp.eq.s32.totalorder %s91, 0
      %s94 = sadd.s32 %s93, 1
      %s95 = scalar_select %p92, %s93, %s94
      %p98 = pneg %p92
      %p99 = scmp.eq.s32.totalorder %s15, 1
      %p100 = por %p98, %p99
      %p101 = scmp.ne.s32.totalorder %s93, %s96
      %p102 = scmp.eq.s32.totalorder %s15, 0
      %p103 = por %p101, %p102
      %p104 = scmp.ne.s32.totalorder %s93, %s96
      %p105 = scmp.eq.s32.totalorder %s20, 1
      %p106 = por %p104, %p105
      %p107 = scmp.ne.s32.totalorder %s96, %s97
      %p108 = scmp.eq.s32.totalorder %s20, 0
      %p109 = por %p107, %p108
      %p110 = scmp.ne.s32.totalorder %s96, %s97
      %p111 = scmp.eq.s32.totalorder %s21, 1
      %p112 = por %p110, %p111
      %p114 = scmp.ne.s32.totalorder %s97, %s113
      %p115 = scmp.eq.s32.totalorder %s21, 0
      %p116 = por %p114, %p115
      %p117 = scmp.le.s32.totalorder 1, %s15
      %p118 = scmp.lt.s32.totalorder %s15, 3
      %p119 = pnand %p117, %p118
      %p120 = pneg %p119
      // Predicated region
      $region9: #{tpu_custom_call.1} parent=5 // pred_check
        _
      $region10: #{tpu_custom_call.1} parent=5 // pred_check_branch
        %122 = sbr.rel (%p119) target = $region12
      $region11: #{tpu_custom_call.1} parent=5 // pred_region
        %s123 = ssub.s32 %s15, 1
        // Predicated region
        $region13: #{tpu_custom_call.1} parent=11 // pred_check
          %p124 = pneg %p62
        $region14: #{tpu_custom_call.1} parent=11 // pred_check_branch
          %126 = sbr.rel (%p124) target = $region16
        $region15: #{tpu_custom_call.1} parent=11 // pred_region
          _
        $region16: #{tpu_custom_call.1} parent=11 // pred_fallthru
          _
        // Predicated region
        $region17: #{tpu_custom_call.1} parent=11 // pred_check
          %p127 = pneg %p83
        $region18: #{tpu_custom_call.1} parent=11 // pred_check_branch
          %129 = sbr.rel (%p127) target = $region20
        $region19: #{tpu_custom_call.1} parent=11 // pred_region
          _
        $region20: #{tpu_custom_call.1} parent=11 // pred_fallthru
          _
      $region12: #{tpu_custom_call.1} parent=5 // pred_fallthru
        _
      %p130 = scmp.lt.s32.totalorder %s15, 2
      // Predicated region
      $region21: #{tpu_custom_call.1} parent=5 // pred_check
        %p131 = pneg %p130
      $region22: #{tpu_custom_call.1} parent=5 // pred_check_branch
        %133 = sbr.rel (%p131) target = $region24
      $region23: #{tpu_custom_call.1} parent=5 // pred_region
        // Predicated region
        $region25: #{tpu_custom_call.1} parent=23 // pred_check
          %p134 = pneg %p35
        $region26: #{tpu_custom_call.1} parent=23 // pred_check_branch
          %136 = sbr.rel (%p134) target = $region28
        $region27: #{tpu_custom_call.1} parent=23 // pred_region
          %s137 = sand.u32 %s25, 1
          %s138 = scalar_lea.sflag [#allocation3], %s137
          %s139 = sand.u32 %s25, 1
          %s140 = smul.addr %s139, 512
          %s141 = scalar_lea.vmem [#allocation2], %s140
          %s142 = smul.u32 2, %s15
          %s144 = ssub.s32 8192, 8192
          %145 = vsyncadd %s138, %s144
          %s146 = smul.addr %s142, 32
          %s147 = smul.addr %s146, 128
          %s148 = scalar_lea.hbm %s0, %s147
          %s149 = sshll.u32 %s141, 4
          %s150 = int_to_ptr.vmem [resolvable:$true] %s149
          %155 = dma.hbm_to_vmem [thread:$0]  %s148, 8192, %s150, %s138, 256, 256, 16
        $region28: #{tpu_custom_call.1} parent=23 // pred_fallthru
          _
      $region24: #{tpu_custom_call.1} parent=5 // pred_fallthru
        _
      %p156 = scmp.le.s32.totalorder 1, %s15
      %p157 = scmp.lt.s32.totalorder %s15, 3
      %p158 = pnand %p156, %p157
      %p159 = pneg %p158
      // Predicated region
      $region29: #{tpu_custom_call.1} parent=5 // pred_check
        _
      $region30: #{tpu_custom_call.1} parent=5 // pred_check_branch
        %161 = sbr.rel (%p158) target = $region32
      $region31: #{tpu_custom_call.1} parent=5 // pred_region
        %s162 = ssub.s32 %s15, 1
        %s163 = sand.u32 %s28, 1
        %s164 = scalar_lea.sflag [#allocation3], %s163
        %s165 = sand.u32 %s28, 1
        %s166 = smul.addr %s165, 512
        %s167 = scalar_lea.vmem [#allocation2], %s166
        // Predicated region
        $region33: #{tpu_custom_call.1} parent=31 // pred_check
          %p168 = pneg %p41
        $region34: #{tpu_custom_call.1} parent=31 // pred_check_branch
          %170 = sbr.rel (%p168) target = $region36
        $region35: #{tpu_custom_call.1} parent=31 // pred_region
          %171 = dma.done %s164, 8192
        $region36: #{tpu_custom_call.1} parent=31 // pred_fallthru
          _
        %s172 = sand.u32 %s28, 1
        %s173 = scalar_lea.sflag [#allocation3], %s172
        %s174 = sand.u32 %s28, 1
        %s175 = smul.addr %s174, 512
        %s176 = scalar_lea.vmem [#allocation2], %s175
        %p177 = pneg %p41
        %p178 = pneg %p38
        %p179 = pneg %p62
        %p180 = pneg %p59
        %p181 = pneg %p83
        %p182 = pneg %p80
        %p183 = pneg %p109
        %p184 = pneg %p106
        %s185 = sand.u32 %s96, 1
        %s186 = scalar_lea.sflag [#allocation4], %s185
        %s187 = sand.u32 %s96, 1
        %s188 = smul.addr %s187, 512
        %s189 = scalar_lea.vmem [#allocation5], %s188
        %s190 = smul.u32 2, %s20
        %s191 = smul.u32 2, %s20
        %v192 = vld [vmem:[%s167] sm:$0xff]
        %v193 = vld [vmem:[%s167 + $0x8] sm:$0xff]
        %v194 = vld [vmem:[%s167 + $0x10] sm:$0xff]
        %v195 = vld [vmem:[%s167 + $0x18] sm:$0xff]
        %v196 = vld [vmem:[%s167 + $0x20] sm:$0xff]
        %v197 = vld [vmem:[%s167 + $0x28] sm:$0xff]
        %v198 = vld [vmem:[%s167 + $0x30] sm:$0xff]
        %v199 = vld [vmem:[%s167 + $0x38] sm:$0xff]
        %v200 = vld [vmem:[%s167 + $0x40] sm:$0xff]
        %v201 = vld [vmem:[%s167 + $0x48] sm:$0xff]
        %v202 = vld [vmem:[%s167 + $0x50] sm:$0xff]
        %v203 = vld [vmem:[%s167 + $0x58] sm:$0xff]
        %v204 = vld [vmem:[%s167 + $0x60] sm:$0xff]
        %v205 = vld [vmem:[%s167 + $0x68] sm:$0xff]
        %v206 = vld [vmem:[%s167 + $0x70] sm:$0xff]
        %v207 = vld [vmem:[%s167 + $0x78] sm:$0xff]
        %v208 = vld [vmem:[%s167 + $0x80] sm:$0xff]
        %v209 = vld [vmem:[%s167 + $0x88] sm:$0xff]
        %v210 = vld [vmem:[%s167 + $0x90] sm:$0xff]
        %v211 = vld [vmem:[%s167 + $0x98] sm:$0xff]
        %v212 = vld [vmem:[%s167 + $0xa0] sm:$0xff]
        %v213 = vld [vmem:[%s167 + $0xa8] sm:$0xff]
        %v214 = vld [vmem:[%s167 + $0xb0] sm:$0xff]
        %v215 = vld [vmem:[%s167 + $0xb8] sm:$0xff]
        %v216 = vld [vmem:[%s167 + $0xc0] sm:$0xff]
        %v217 = vld [vmem:[%s167 + $0xc8] sm:$0xff]
        %v218 = vld [vmem:[%s167 + $0xd0] sm:$0xff]
        %v219 = vld [vmem:[%s167 + $0xd8] sm:$0xff]
        %v220 = vld [vmem:[%s167 + $0xe0] sm:$0xff]
        %v221 = vld [vmem:[%s167 + $0xe8] sm:$0xff]
        %v222 = vld [vmem:[%s167 + $0xf0] sm:$0xff]
        %v223 = vld [vmem:[%s167 + $0xf8] sm:$0xff]
        %v224 = vld [vmem:[%s167 + $0x100] sm:$0xff]
        %v225 = vld [vmem:[%s167 + $0x108] sm:$0xff]
        %v226 = vld [vmem:[%s167 + $0x110] sm:$0xff]
        %v227 = vld [vmem:[%s167 + $0x118] sm:$0xff]
        %v228 = vld [vmem:[%s167 + $0x120] sm:$0xff]
        %v229 = vld [vmem:[%s167 + $0x128] sm:$0xff]
        %v230 = vld [vmem:[%s167 + $0x130] sm:$0xff]
        %v231 = vld [vmem:[%s167 + $0x138] sm:$0xff]
        %v232 = vld [vmem:[%s167 + $0x140] sm:$0xff]
        %v233 = vld [vmem:[%s167 + $0x148] sm:$0xff]
        %v234 = vld [vmem:[%s167 + $0x150] sm:$0xff]
        %v235 = vld [vmem:[%s167 + $0x158] sm:$0xff]
        %v236 = vld [vmem:[%s167 + $0x160] sm:$0xff]
        %v237 = vld [vmem:[%s167 + $0x168] sm:$0xff]
        %v238 = vld [vmem:[%s167 + $0x170] sm:$0xff]
        %v239 = vld [vmem:[%s167 + $0x178] sm:$0xff]
        %v240 = vld [vmem:[%s167 + $0x180] sm:$0xff]
        %v241 = vld [vmem:[%s167 + $0x188] sm:$0xff]
        %v242 = vld [vmem:[%s167 + $0x190] sm:$0xff]
        %v243 = vld [vmem:[%s167 + $0x198] sm:$0xff]
        %v244 = vld [vmem:[%s167 + $0x1a0] sm:$0xff]
        %v245 = vld [vmem:[%s167 + $0x1a8] sm:$0xff]
        %v246 = vld [vmem:[%s167 + $0x1b0] sm:$0xff]
        %v247 = vld [vmem:[%s167 + $0x1b8] sm:$0xff]
        %v248 = vld [vmem:[%s167 + $0x1c0] sm:$0xff]
        %v249 = vld [vmem:[%s167 + $0x1c8] sm:$0xff]
        %v250 = vld [vmem:[%s167 + $0x1d0] sm:$0xff]
        %v251 = vld [vmem:[%s167 + $0x1d8] sm:$0xff]
        %v252 = vld [vmem:[%s167 + $0x1e0] sm:$0xff]
        %v253 = vld [vmem:[%s167 + $0x1e8] sm:$0xff]
        %v254 = vld [vmem:[%s167 + $0x1f0] sm:$0xff]
        %v255 = vld [vmem:[%s167 + $0x1f8] sm:$0xff]
        %v256 = vadd.f32 %v192, %v193
        %257 = vadd.xlane.f32.xlu0 %v256
        %v258 = vpop.xlane.xlu0 %257
        %v259 = vadd.f32 %v194, %v195
        %260 = vadd.xlane.f32.xlu0 %v259
        %v261 = vpop.xlane.xlu0 %260
        %v262 = vadd.f32 %v196, %v197
        %263 = vadd.xlane.f32.xlu0 %v262
        %v264 = vpop.xlane.xlu0 %263
        %v265 = vadd.f32 %v198, %v199
        %266 = vadd.xlane.f32.xlu0 %v265
        %v267 = vpop.xlane.xlu0 %266
        %v268 = vadd.f32 %v200, %v201
        %269 = vadd.xlane.f32.xlu0 %v268
        %v270 = vpop.xlane.xlu0 %269
        %v271 = vadd.f32 %v202, %v203
        %272 = vadd.xlane.f32.xlu0 %v271
        %v273 = vpop.xlane.xlu0 %272
        %v274 = vadd.f32 %v204, %v205
        %275 = vadd.xlane.f32.xlu0 %v274
        %v276 = vpop.xlane.xlu0 %275
        %v277 = vadd.f32 %v206, %v207
        %278 = vadd.xlane.f32.xlu0 %v277
        %v279 = vpop.xlane.xlu0 %278
        %v280 = vadd.f32 %v208, %v209
        %281 = vadd.xlane.f32.xlu0 %v280
        %v282 = vpop.xlane.xlu0 %281
        %v283 = vadd.f32 %v210, %v211
        %284 = vadd.xlane.f32.xlu0 %v283
        %v285 = vpop.xlane.xlu0 %284
        %v286 = vadd.f32 %v212, %v213
        %287 = vadd.xlane.f32.xlu0 %v286
        %v288 = vpop.xlane.xlu0 %287
        %v289 = vadd.f32 %v214, %v215
        %290 = vadd.xlane.f32.xlu0 %v289
        %v291 = vpop.xlane.xlu0 %290
        %v292 = vadd.f32 %v216, %v217
        %293 = vadd.xlane.f32.xlu0 %v292
        %v294 = vpop.xlane.xlu0 %293
        %v295 = vadd.f32 %v218, %v219
        %296 = vadd.xlane.f32.xlu0 %v295
        %v297 = vpop.xlane.xlu0 %296
        %v298 = vadd.f32 %v220, %v221
        %299 = vadd.xlane.f32.xlu0 %v298
        %v300 = vpop.xlane.xlu0 %299
        %v301 = vadd.f32 %v222, %v223
        %302 = vadd.xlane.f32.xlu0 %v301
        %v303 = vpop.xlane.xlu0 %302
        %v304 = vadd.f32 %v224, %v225
        %305 = vadd.xlane.f32.xlu0 %v304
        %v306 = vpop.xlane.xlu0 %305
        %v307 = vadd.f32 %v226, %v227
        %308 = vadd.xlane.f32.xlu0 %v307
        %v309 = vpop.xlane.xlu0 %308
        %v310 = vadd.f32 %v228, %v229
        %311 = vadd.xlane.f32.xlu0 %v310
        %v312 = vpop.xlane.xlu0 %311
        %v313 = vadd.f32 %v230, %v231
        %314 = vadd.xlane.f32.xlu0 %v313
        %v315 = vpop.xlane.xlu0 %314
        %v316 = vadd.f32 %v232, %v233
        %317 = vadd.xlane.f32.xlu0 %v316
        %v318 = vpop.xlane.xlu0 %317
        %v319 = vadd.f32 %v234, %v235
        %320 = vadd.xlane.f32.xlu0 %v319
        %v321 = vpop.xlane.xlu0 %320
        %v322 = vadd.f32 %v236, %v237
        %323 = vadd.xlane.f32.xlu0 %v322
        %v324 = vpop.xlane.xlu0 %323
        %v325 = vadd.f32 %v238, %v239
        %326 = vadd.xlane.f32.xlu0 %v325
        %v327 = vpop.xlane.xlu0 %326
        %v328 = vadd.f32 %v240, %v241
        %329 = vadd.xlane.f32.xlu0 %v328
        %v330 = vpop.xlane.xlu0 %329
        %v331 = vadd.f32 %v242, %v243
        %332 = vadd.xlane.f32.xlu0 %v331
        %v333 = vpop.xlane.xlu0 %332
        %v334 = vadd.f32 %v244, %v245
        %335 = vadd.xlane.f32.xlu0 %v334
        %v336 = vpop.xlane.xlu0 %335
        %v337 = vadd.f32 %v246, %v247
        %338 = vadd.xlane.f32.xlu0 %v337
        %v339 = vpop.xlane.xlu0 %338
        %v340 = vadd.f32 %v248, %v249
        %341 = vadd.xlane.f32.xlu0 %v340
        %v342 = vpop.xlane.xlu0 %341
        %v343 = vadd.f32 %v250, %v251
        %344 = vadd.xlane.f32.xlu0 %v343
        %v345 = vpop.xlane.xlu0 %344
        %v346 = vadd.f32 %v252, %v253
        %347 = vadd.xlane.f32.xlu0 %v346
        %v348 = vpop.xlane.xlu0 %347
        %v349 = vadd.f32 %v254, %v255
        %350 = vadd.xlane.f32.xlu0 %v349
        %v351 = vpop.xlane.xlu0 %350
        %v352 = vmul.f32 %v258, 0.00390625
        %v353 = vmul.f32 %v261, 0.00390625
        %v354 = vmul.f32 %v264, 0.00390625
        %v355 = vmul.f32 %v267, 0.00390625
        %v356 = vmul.f32 %v270, 0.00390625
        %v357 = vmul.f32 %v273, 0.00390625
        %v358 = vmul.f32 %v276, 0.00390625
        %v359 = vmul.f32 %v279, 0.00390625
        %v360 = vmul.f32 %v282, 0.00390625
        %v361 = vmul.f32 %v285, 0.00390625
        %v362 = vmul.f32 %v288, 0.00390625
        %v363 = vmul.f32 %v291, 0.00390625
        %v364 = vmul.f32 %v294, 0.00390625
        %v365 = vmul.f32 %v297, 0.00390625
        %v366 = vmul.f32 %v300, 0.00390625
        %v367 = vmul.f32 %v303, 0.00390625
        %v368 = vmul.f32 %v306, 0.00390625
        %v369 = vmul.f32 %v309, 0.00390625
        %v370 = vmul.f32 %v312, 0.00390625
        %v371 = vmul.f32 %v315, 0.00390625
        %v372 = vmul.f32 %v318, 0.00390625
        %v373 = vmul.f32 %v321, 0.00390625
        %v374 = vmul.f32 %v324, 0.00390625
        %v375 = vmul.f32 %v327, 0.00390625
        %v376 = vmul.f32 %v330, 0.00390625
        %v377 = vmul.f32 %v333, 0.00390625
        %v378 = vmul.f32 %v336, 0.00390625
        %v379 = vmul.f32 %v339, 0.00390625
        %v380 = vmul.f32 %v342, 0.00390625
        %v381 = vmul.f32 %v345, 0.00390625
        %v382 = vmul.f32 %v348, 0.00390625
        %v383 = vmul.f32 %v351, 0.00390625
        %v384 = vld [vmem:[%s1] sm:$0xff]
        %v385 = vld [vmem:[%s1 + $0x8] sm:$0xff]
        %v386 = vld [vmem:[%s1 + $0x10] sm:$0xff]
        %v387 = vld [vmem:[%s1 + $0x18] sm:$0xff]
        %v388 = vld [vmem:[%s1 + $0x20] sm:$0xff]
        %v389 = vld [vmem:[%s1 + $0x28] sm:$0xff]
        %v390 = vld [vmem:[%s1 + $0x30] sm:$0xff]
        %v391 = vld [vmem:[%s1 + $0x38] sm:$0xff]
        %v392 = vld [vmem:[%s1 + $0x40] sm:$0xff]
        %v393 = vld [vmem:[%s1 + $0x48] sm:$0xff]
        %v394 = vld [vmem:[%s1 + $0x50] sm:$0xff]
        %v395 = vld [vmem:[%s1 + $0x58] sm:$0xff]
        %v396 = vld [vmem:[%s1 + $0x60] sm:$0xff]
        %v397 = vld [vmem:[%s1 + $0x68] sm:$0xff]
        %v398 = vld [vmem:[%s1 + $0x70] sm:$0xff]
        %v399 = vld [vmem:[%s1 + $0x78] sm:$0xff]
        %v432 = vlaneseq
        %v433 = vand.u32 %v432, 127
        %v434 = vlaneseq
        %v435 = vshrl.u32 %v434, 7
        %v436 = vsub.s32 %v433, %v435
        %v437 = vrot.slane %v352, %v436
        %v438 = vadd.s32 %v433, 4294967288
        %v439 = vlaneseq
        %v440 = vshrl.u32 %v439, 7
        %v441 = vsub.s32 %v438, %v440
        %v442 = vrot.slane %v353, %v441
        %vm443 = vcmask 130112
        %v444 = vsel %vm443, %v442, %v437
        %v445 = vadd.s32 %v433, 4294967280
        %v446 = vlaneseq
        %v447 = vshrl.u32 %v446, 7
        %v448 = vsub.s32 %v445, %v447
        %v449 = vrot.slane %v354, %v448
        %vm450 = vcmask 195712
        %v451 = vsel %vm450, %v449, %v444
        %v452 = vadd.s32 %v433, 4294967272
        %v453 = vlaneseq
        %v454 = vshrl.u32 %v453, 7
        %v455 = vsub.s32 %v452, %v454
        %v456 = vrot.slane %v355, %v455
        %vm457 = vcmask 261312
        %v458 = vsel %vm457, %v456, %v451
        %v459 = vadd.s32 %v433, 4294967264
        %v460 = vlaneseq
        %v461 = vshrl.u32 %v460, 7
        %v462 = vsub.s32 %v459, %v461
        %v463 = vrot.slane %v356, %v462
        %vm464 = vcmask 326912
        %v465 = vsel %vm464, %v463, %v458
        %v466 = vadd.s32 %v433, 4294967256
        %v467 = vlaneseq
        %v468 = vshrl.u32 %v467, 7
        %v469 = vsub.s32 %v466, %v468
        %v470 = vrot.slane %v357, %v469
        %vm471 = vcmask 392512
        %v472 = vsel %vm471, %v470, %v465
        %v473 = vadd.s32 %v433, 4294967248
        %v474 = vlaneseq
        %v475 = vshrl.u32 %v474, 7
        %v476 = vsub.s32 %v473, %v475
        %v477 = vrot.slane %v358, %v476
        %vm478 = vcmask 458112
        %v479 = vsel %vm478, %v477, %v472
        %v480 = vadd.s32 %v433, 4294967240
        %v481 = vlaneseq
        %v482 = vshrl.u32 %v481, 7
        %v483 = vsub.s32 %v480, %v482
        %v484 = vrot.slane %v359, %v483
        %vm485 = vcmask 523712
        %v486 = vsel %vm485, %v484, %v479
        %v487 = vadd.s32 %v433, 4294967232
        %v488 = vlaneseq
        %v489 = vshrl.u32 %v488, 7
        %v490 = vsub.s32 %v487, %v489
        %v491 = vrot.slane %v360, %v490
        %vm492 = vcmask 589312
        %v493 = vsel %vm492, %v491, %v486
        %v494 = vadd.s32 %v433, 4294967224
        %v495 = vlaneseq
        %v496 = vshrl.u32 %v495, 7
        %v497 = vsub.s32 %v494, %v496
        %v498 = vrot.slane %v361, %v497
        %vm499 = vcmask 654912
        %v500 = vsel %vm499, %v498, %v493
        %v501 = vadd.s32 %v433, 4294967216
        %v502 = vlaneseq
        %v503 = vshrl.u32 %v502, 7
        %v504 = vsub.s32 %v501, %v503
        %v505 = vrot.slane %v362, %v504
        %vm506 = vcmask 720512
        %v507 = vsel %vm506, %v505, %v500
        %v508 = vadd.s32 %v433, 4294967208
        %v509 = vlaneseq
        %v510 = vshrl.u32 %v509, 7
        %v511 = vsub.s32 %v508, %v510
        %v512 = vrot.slane %v363, %v511
        %vm513 = vcmask 786112
        %v514 = vsel %vm513, %v512, %v507
        %v515 = vadd.s32 %v433, 4294967200
        %v516 = vlaneseq
        %v517 = vshrl.u32 %v516, 7
        %v518 = vsub.s32 %v515, %v517
        %v519 = vrot.slane %v364, %v518
        %vm520 = vcmask 851712
        %v521 = vsel %vm520, %v519, %v514
        %v522 = vadd.s32 %v433, 4294967192
        %v523 = vlaneseq
        %v524 = vshrl.u32 %v523, 7
        %v525 = vsub.s32 %v522, %v524
        %v526 = vrot.slane %v365, %v525
        %vm527 = vcmask 917312
        %v528 = vsel %vm527, %v526, %v521
        %v529 = vadd.s32 %v433, 4294967184
        %v530 = vlaneseq
        %v531 = vshrl.u32 %v530, 7
        %v532 = vsub.s32 %v529, %v531
        %v533 = vrot.slane %v366, %v532
        %vm534 = vcmask 982912
        %v535 = vsel %vm534, %v533, %v528
        %v536 = vadd.s32 %v433, 4294967176
        %v537 = vlaneseq
        %v538 = vshrl.u32 %v537, 7
        %v539 = vsub.s32 %v536, %v538
        %v540 = vrot.slane %v367, %v539
        %vm541 = vcmask 1048512
        %v542 = vsel %vm541, %v540, %v535
        %v543 = vlaneseq
        %v544 = vshrl.u32 %v543, 7
        %v545 = vsub.s32 %v433, %v544
        %v546 = vrot.slane %v368, %v545
        %v547 = vlaneseq
        %v548 = vshrl.u32 %v547, 7
        %v549 = vsub.s32 %v438, %v548
        %v550 = vrot.slane %v369, %v549
        %v551 = vsel %vm443, %v550, %v546
        %v552 = vlaneseq
        %v553 = vshrl.u32 %v552, 7
        %v554 = vsub.s32 %v445, %v553
        %v555 = vrot.slane %v370, %v554
        %v556 = vsel %vm450, %v555, %v551
        %v557 = vlaneseq
        %v558 = vshrl.u32 %v557, 7
        %v559 = vsub.s32 %v452, %v558
        %v560 = vrot.slane %v371, %v559
        %v561 = vsel %vm457, %v560, %v556
        %v562 = vlaneseq
        %v563 = vshrl.u32 %v562, 7
        %v564 = vsub.s32 %v459, %v563
        %v565 = vrot.slane %v372, %v564
        %v566 = vsel %vm464, %v565, %v561
        %v567 = vlaneseq
        %v568 = vshrl.u32 %v567, 7
        %v569 = vsub.s32 %v466, %v568
        %v570 = vrot.slane %v373, %v569
        %v571 = vsel %vm471, %v570, %v566
        %v572 = vlaneseq
        %v573 = vshrl.u32 %v572, 7
        %v574 = vsub.s32 %v473, %v573
        %v575 = vrot.slane %v374, %v574
        %v576 = vsel %vm478, %v575, %v571
        %v577 = vlaneseq
        %v578 = vshrl.u32 %v577, 7
        %v579 = vsub.s32 %v480, %v578
        %v580 = vrot.slane %v375, %v579
        %v581 = vsel %vm485, %v580, %v576
        %v582 = vlaneseq
        %v583 = vshrl.u32 %v582, 7
        %v584 = vsub.s32 %v487, %v583
        %v585 = vrot.slane %v376, %v584
        %v586 = vsel %vm492, %v585, %v581
        %v587 = vlaneseq
        %v588 = vshrl.u32 %v587, 7
        %v589 = vsub.s32 %v494, %v588
        %v590 = vrot.slane %v377, %v589
        %v591 = vsel %vm499, %v590, %v586
        %v592 = vlaneseq
        %v593 = vshrl.u32 %v592, 7
        %v594 = vsub.s32 %v501, %v593
        %v595 = vrot.slane %v378, %v594
        %v596 = vsel %vm506, %v595, %v591
        %v597 = vlaneseq
        %v598 = vshrl.u32 %v597, 7
        %v599 = vsub.s32 %v508, %v598
        %v600 = vrot.slane %v379, %v599
        %v601 = vsel %vm513, %v600, %v596
        %v602 = vlaneseq
        %v603 = vshrl.u32 %v602, 7
        %v604 = vsub.s32 %v515, %v603
        %v605 = vrot.slane %v380, %v604
        %v606 = vsel %vm520, %v605, %v601
        %v607 = vlaneseq
        %v608 = vshrl.u32 %v607, 7
        %v609 = vsub.s32 %v522, %v608
        %v610 = vrot.slane %v381, %v609
        %v611 = vsel %vm527, %v610, %v606
        %v612 = vlaneseq
        %v613 = vshrl.u32 %v612, 7
        %v614 = vsub.s32 %v529, %v613
        %v615 = vrot.slane %v382, %v614
        %v616 = vsel %vm534, %v615, %v611
        %v617 = vlaneseq
        %v618 = vshrl.u32 %v617, 7
        %v619 = vsub.s32 %v536, %v618
        %v620 = vrot.slane %v383, %v619
        %v621 = vsel %vm541, %v620, %v616
        %vm622 = vcmask 1041409
        %v623 = vsel %vm622, %v621, %v542
        %625 = vmatprep.subr.mxu0 0.0
        %626 = vmatpush1.msra.mxu0 %v384
        %627 = vmatprep.subr.mxu0 0.0
        %628 = vmatpush1.msra.mxu0 %v385
        %629 = vmatprep.subr.mxu0 0.0
        %630 = vmatpush1.msra.mxu0 %v386
        %631 = vmatprep.subr.mxu0 0.0
        %632 = vmatpush1.msra.mxu0 %v387
        %633 = vmatprep.subr.mxu0 0.0
        %634 = vmatpush1.msra.mxu0 %v388
        %635 = vmatprep.subr.mxu0 0.0
        %636 = vmatpush1.msra.mxu0 %v389
        %637 = vmatprep.subr.mxu0 0.0
        %638 = vmatpush1.msra.mxu0 %v390
        %639 = vmatprep.subr.mxu0 0.0
        %640 = vmatpush1.msra.mxu0 %v391
        %641 = vmatprep.subr.mxu0 0.0
        %642 = vmatpush1.msra.mxu0 %v392
        %643 = vmatprep.subr.mxu0 0.0
        %644 = vmatpush1.msra.mxu0 %v393
        %645 = vmatprep.subr.mxu0 0.0
        %646 = vmatpush1.msra.mxu0 %v394
        %647 = vmatprep.subr.mxu0 0.0
        %648 = vmatpush1.msra.mxu0 %v395
        %649 = vmatprep.subr.mxu0 0.0
        %650 = vmatpush1.msra.mxu0 %v396
        %651 = vmatprep.subr.mxu0 0.0
        %652 = vmatpush1.msra.mxu0 %v397
        %653 = vmatprep.subr.mxu0 0.0
        %654 = vmatpush1.msra.mxu0 %v398
        %655 = vmatprep.subr.mxu0 0.0
        %656 = vmatpush1.msra.mxu0 %v399
        %657 = vmatprep.subr.mxu0 0.0
        %658 = vmatpush1.msra.mxu0 0.0
        %659 = vmatprep.subr.mxu0 0.0
        %660 = vmatpush1.msra.mxu0 0.0
        %661 = vmatprep.subr.mxu0 0.0
        %662 = vmatpush1.msra.mxu0 0.0
        %663 = vmatprep.subr.mxu0 0.0
        %664 = vmatpush1.msra.mxu0 0.0
        %665 = vmatprep.subr.mxu0 0.0
        %666 = vmatpush1.msra.mxu0 0.0
        %667 = vmatprep.subr.mxu0 0.0
        %668 = vmatpush1.msra.mxu0 0.0
        %669 = vmatprep.subr.mxu0 0.0
        %670 = vmatpush1.msra.mxu0 0.0
        %671 = vmatprep.subr.mxu0 0.0
        %672 = vmatpush1.msra.mxu0 0.0
        %673 = vmatprep.subr.mxu0 0.0
        %674 = vmatpush1.msra.mxu0 0.0
        %675 = vmatprep.subr.mxu0 0.0
        %676 = vmatpush1.msra.mxu0 0.0
        %677 = vmatprep.subr.mxu0 0.0
        %678 = vmatpush1.msra.mxu0 0.0
        %679 = vmatprep.subr.mxu0 0.0
        %680 = vmatpush1.msra.mxu0 0.0
        %681 = vmatprep.subr.mxu0 0.0
        %682 = vmatpush1.msra.mxu0 0.0
        %683 = vmatprep.subr.mxu0 0.0
        %684 = vmatpush1.msra.mxu0 0.0
        %685 = vmatprep.subr.mxu0 0.0
        %686 = vmatpush1.msra.mxu0 0.0
        %687 = vmatprep.subr.mxu0 0.0
        %688 = vmatpush1.msra.mxu0 0.0
        %689 = vmatprep.mubr.f32.mxu0 0.0
        %690 = vmatmul.mubr.f32.gmra.mrb[0].mxu0 %v623
        %v691 = vpop.f32.mrb[0].mxu0
        %v692 = vadd.f32 0.0, %v691
        %v693 = vpop.f32.mrb[0].mxu0
        %694 = vdwg.mxu0
        %v695 = vmax.f32 %v692, 0.0
        %v696 = vld [vmem:[%s2] sm:$0xff]
        %vm697 = vcmask 64512
        %v699 = vsel %vm697, %v695, 0
        %701 = vmatprep.subr.mxu0 0.0
        %702 = vmatpush1.msra.mxu0 %v696
        %703 = vmatprep.subr.mxu0 0.0
        %704 = vmatpush1.msra.mxu0 0.0
        %705 = vmatprep.subr.mxu0 0.0
        %706 = vmatpush1.msra.mxu0 0.0
        %707 = vmatprep.subr.mxu0 0.0
        %708 = vmatpush1.msra.mxu0 0.0
        %709 = vmatprep.subr.mxu0 0.0
        %710 = vmatpush1.msra.mxu0 0.0
        %711 = vmatprep.subr.mxu0 0.0
        %712 = vmatpush1.msra.mxu0 0.0
        %713 = vmatprep.subr.mxu0 0.0
        %714 = vmatpush1.msra.mxu0 0.0
        %715 = vmatprep.subr.mxu0 0.0
        %716 = vmatpush1.msra.mxu0 0.0
        %717 = vmatprep.subr.mxu0 0.0
        %718 = vmatpush1.msra.mxu0 0.0
        %719 = vmatprep.subr.mxu0 0.0
        %720 = vmatpush1.msra.mxu0 0.0
        %721 = vmatprep.subr.mxu0 0.0
        %722 = vmatpush1.msra.mxu0 0.0
        %723 = vmatprep.subr.mxu0 0.0
        %724 = vmatpush1.msra.mxu0 0.0
        %725 = vmatprep.subr.mxu0 0.0
        %726 = vmatpush1.msra.mxu0 0.0
        %727 = vmatprep.subr.mxu0 0.0
        %728 = vmatpush1.msra.mxu0 0.0
        %729 = vmatprep.subr.mxu0 0.0
        %730 = vmatpush1.msra.mxu0 0.0
        %731 = vmatprep.subr.mxu0 0.0
        %732 = vmatpush1.msra.mxu0 0.0
        %733 = vmatprep.subr.mxu0 0.0
        %734 = vmatpush1.msra.mxu0 0.0
        %735 = vmatprep.subr.mxu0 0.0
        %736 = vmatpush1.msra.mxu0 0.0
        %737 = vmatprep.subr.mxu0 0.0
        %738 = vmatpush1.msra.mxu0 0.0
        %739 = vmatprep.subr.mxu0 0.0
        %740 = vmatpush1.msra.mxu0 0.0
        %741 = vmatprep.subr.mxu0 0.0
        %742 = vmatpush1.msra.mxu0 0.0
        %743 = vmatprep.subr.mxu0 0.0
        %744 = vmatpush1.msra.mxu0 0.0
        %745 = vmatprep.subr.mxu0 0.0
        %746 = vmatpush1.msra.mxu0 0.0
        %747 = vmatprep.subr.mxu0 0.0
        %748 = vmatpush1.msra.mxu0 0.0
        %749 = vmatprep.subr.mxu0 0.0
        %750 = vmatpush1.msra.mxu0 0.0
        %751 = vmatprep.subr.mxu0 0.0
        %752 = vmatpush1.msra.mxu0 0.0
        %753 = vmatprep.subr.mxu0 0.0
        %754 = vmatpush1.msra.mxu0 0.0
        %755 = vmatprep.subr.mxu0 0.0
        %756 = vmatpush1.msra.mxu0 0.0
        %757 = vmatprep.subr.mxu0 0.0
        %758 = vmatpush1.msra.mxu0 0.0
        %759 = vmatprep.subr.mxu0 0.0
        %760 = vmatpush1.msra.mxu0 0.0
        %761 = vmatprep.subr.mxu0 0.0
        %762 = vmatpush1.msra.mxu0 0.0
        %763 = vmatprep.subr.mxu0 0.0
        %764 = vmatpush1.msra.mxu0 0.0
        %765 = vmatprep.mubr.f32.mxu0 0.0
        %766 = vmatmul.mubr.f32.gmra.mrb[0].mxu0 %v699
        %v767 = vpop.f32.mrb[0].mxu0
        %v768 = vadd.f32 0.0, %v767
        %v769 = vpop.f32.mrb[0].mxu0
        %770 = vdwg.mxu0
        %v771 = vxor.u32 %v768, 2147483648
        %v772 = vmul.f32 %v771, 1.442695
        %v773 = vpow.pop %v772
        %v774 = vadd.f32 %v773, 1.0
        %v775 = vrcp.pop %v774
        %v776 = vmul.f32 1.0, %v775
        %v777 = vlaneseq
        %v778 = vshrl.u32 %v777, 7
        %v779 = vsub.s32 0, %v778
        %v780 = vrot.slane %v776, %v779
        %782 = vbcast.lane.b32.xlu0 %v780, 256
        %v783 = vpop.permute.xlu0 %782
        %s785 = sor.u32 256, 8
        %786 = vbcast.lane.b32.xlu0 %v780, %s785
        %v787 = vpop.permute.xlu0 %786
        %s789 = sor.u32 256, 16
        %790 = vbcast.lane.b32.xlu0 %v780, %s789
        %v791 = vpop.permute.xlu0 %790
        %s793 = sor.u32 256, 24
        %794 = vbcast.lane.b32.xlu0 %v780, %s793
        %v795 = vpop.permute.xlu0 %794
        %s797 = sor.u32 256, 32
        %798 = vbcast.lane.b32.xlu0 %v780, %s797
        %v799 = vpop.permute.xlu0 %798
        %s801 = sor.u32 256, 40
        %802 = vbcast.lane.b32.xlu0 %v780, %s801
        %v803 = vpop.permute.xlu0 %802
        %s805 = sor.u32 256, 48
        %806 = vbcast.lane.b32.xlu0 %v780, %s805
        %v807 = vpop.permute.xlu0 %806
        %s809 = sor.u32 256, 56
        %810 = vbcast.lane.b32.xlu0 %v780, %s809
        %v811 = vpop.permute.xlu0 %810
        %s813 = sor.u32 256, 64
        %814 = vbcast.lane.b32.xlu0 %v780, %s813
        %v815 = vpop.permute.xlu0 %814
        %s817 = sor.u32 256, 72
        %818 = vbcast.lane.b32.xlu0 %v780, %s817
        %v819 = vpop.permute.xlu0 %818
        %s821 = sor.u32 256, 80
        %822 = vbcast.lane.b32.xlu0 %v780, %s821
        %v823 = vpop.permute.xlu0 %822
        %s825 = sor.u32 256, 88
        %826 = vbcast.lane.b32.xlu0 %v780, %s825
        %v827 = vpop.permute.xlu0 %826
        %s829 = sor.u32 256, 96
        %830 = vbcast.lane.b32.xlu0 %v780, %s829
        %v831 = vpop.permute.xlu0 %830
        %s833 = sor.u32 256, 104
        %834 = vbcast.lane.b32.xlu0 %v780, %s833
        %v835 = vpop.permute.xlu0 %834
        %s837 = sor.u32 256, 112
        %838 = vbcast.lane.b32.xlu0 %v780, %s837
        %v839 = vpop.permute.xlu0 %838
        %s841 = sor.u32 256, 120
        %842 = vbcast.lane.b32.xlu0 %v780, %s841
        %v843 = vpop.permute.xlu0 %842
        %v844 = vlaneseq
        %v845 = vshrl.u32 %v844, 7
        %v846 = vsub.s32 1, %v845
        %v847 = vrot.slane %v776, %v846
        %849 = vbcast.lane.b32.xlu0 %v847, 256
        %v850 = vpop.permute.xlu0 %849
        %s852 = sor.u32 256, 8
        %853 = vbcast.lane.b32.xlu0 %v847, %s852
        %v854 = vpop.permute.xlu0 %853
        %s856 = sor.u32 256, 16
        %857 = vbcast.lane.b32.xlu0 %v847, %s856
        %v858 = vpop.permute.xlu0 %857
        %s860 = sor.u32 256, 24
        %861 = vbcast.lane.b32.xlu0 %v847, %s860
        %v862 = vpop.permute.xlu0 %861
        %s864 = sor.u32 256, 32
        %865 = vbcast.lane.b32.xlu0 %v847, %s864
        %v866 = vpop.permute.xlu0 %865
        %s868 = sor.u32 256, 40
        %869 = vbcast.lane.b32.xlu0 %v847, %s868
        %v870 = vpop.permute.xlu0 %869
        %s872 = sor.u32 256, 48
        %873 = vbcast.lane.b32.xlu0 %v847, %s872
        %v874 = vpop.permute.xlu0 %873
        %s876 = sor.u32 256, 56
        %877 = vbcast.lane.b32.xlu0 %v847, %s876
        %v878 = vpop.permute.xlu0 %877
        %s880 = sor.u32 256, 64
        %881 = vbcast.lane.b32.xlu0 %v847, %s880
        %v882 = vpop.permute.xlu0 %881
        %s884 = sor.u32 256, 72
        %885 = vbcast.lane.b32.xlu0 %v847, %s884
        %v886 = vpop.permute.xlu0 %885
        %s888 = sor.u32 256, 80
        %889 = vbcast.lane.b32.xlu0 %v847, %s888
        %v890 = vpop.permute.xlu0 %889
        %s892 = sor.u32 256, 88
        %893 = vbcast.lane.b32.xlu0 %v847, %s892
        %v894 = vpop.permute.xlu0 %893
        %s896 = sor.u32 256, 96
        %897 = vbcast.lane.b32.xlu0 %v847, %s896
        %v898 = vpop.permute.xlu0 %897
        %s900 = sor.u32 256, 104
        %901 = vbcast.lane.b32.xlu0 %v847, %s900
        %v902 = vpop.permute.xlu0 %901
        %s904 = sor.u32 256, 112
        %905 = vbcast.lane.b32.xlu0 %v847, %s904
        %v906 = vpop.permute.xlu0 %905
        %s908 = sor.u32 256, 120
        %909 = vbcast.lane.b32.xlu0 %v847, %s908
        %v910 = vpop.permute.xlu0 %909
        %v911 = vmul.f32 %v192, %v783
        %v912 = vmul.f32 %v193, %v783
        %v913 = vmul.f32 %v194, %v787
        %v914 = vmul.f32 %v195, %v787
        %v915 = vmul.f32 %v196, %v791
        %v916 = vmul.f32 %v197, %v791
        %v917 = vmul.f32 %v198, %v795
        %v918 = vmul.f32 %v199, %v795
        %v919 = vmul.f32 %v200, %v799
        %v920 = vmul.f32 %v201, %v799
        %v921 = vmul.f32 %v202, %v803
        %v922 = vmul.f32 %v203, %v803
        %v923 = vmul.f32 %v204, %v807
        %v924 = vmul.f32 %v205, %v807
        %v925 = vmul.f32 %v206, %v811
        %v926 = vmul.f32 %v207, %v811
        %v927 = vmul.f32 %v208, %v815
        %v928 = vmul.f32 %v209, %v815
        %v929 = vmul.f32 %v210, %v819
        %v930 = vmul.f32 %v211, %v819
        %v931 = vmul.f32 %v212, %v823
        %v932 = vmul.f32 %v213, %v823
        %v933 = vmul.f32 %v214, %v827
        %v934 = vmul.f32 %v215, %v827
        %v935 = vmul.f32 %v216, %v831
        %v936 = vmul.f32 %v217, %v831
        %v937 = vmul.f32 %v218, %v835
        %v938 = vmul.f32 %v219, %v835
        %v939 = vmul.f32 %v220, %v839
        %v940 = vmul.f32 %v221, %v839
        %v941 = vmul.f32 %v222, %v843
        %v942 = vmul.f32 %v223, %v843
        %v943 = vmul.f32 %v224, %v850
        %v944 = vmul.f32 %v225, %v850
        %v945 = vmul.f32 %v226, %v854
        %v946 = vmul.f32 %v227, %v854
        %v947 = vmul.f32 %v228, %v858
        %v948 = vmul.f32 %v229, %v858
        %v949 = vmul.f32 %v230, %v862
        %v950 = vmul.f32 %v231, %v862
        %v951 = vmul.f32 %v232, %v866
        %v952 = vmul.f32 %v233, %v866
        %v953 = vmul.f32 %v234, %v870
        %v954 = vmul.f32 %v235, %v870
        %v955 = vmul.f32 %v236, %v874
        %v956 = vmul.f32 %v237, %v874
        %v957 = vmul.f32 %v238, %v878
        %v958 = vmul.f32 %v239, %v878
        %v959 = vmul.f32 %v240, %v882
        %v960 = vmul.f32 %v241, %v882
        %v961 = vmul.f32 %v242, %v886
        %v962 = vmul.f32 %v243, %v886
        %v963 = vmul.f32 %v244, %v890
        %v964 = vmul.f32 %v245, %v890
        %v965 = vmul.f32 %v246, %v894
        %v966 = vmul.f32 %v247, %v894
        %v967 = vmul.f32 %v248, %v898
        %v968 = vmul.f32 %v249, %v898
        %v969 = vmul.f32 %v250, %v902
        %v970 = vmul.f32 %v251, %v902
        %v971 = vmul.f32 %v252, %v906
        %v972 = vmul.f32 %v253, %v906
        %v973 = vmul.f32 %v254, %v910
        %v974 = vmul.f32 %v255, %v910
        %975 = vst [vmem:[%s189] sm:$0xff] %v911
        %976 = vst [vmem:[%s189 + $0x8] sm:$0xff] %v912
        %977 = vst [vmem:[%s189 + $0x10] sm:$0xff] %v913
        %978 = vst [vmem:[%s189 + $0x18] sm:$0xff] %v914
        %979 = vst [vmem:[%s189 + $0x20] sm:$0xff] %v915
        %980 = vst [vmem:[%s189 + $0x28] sm:$0xff] %v916
        %981 = vst [vmem:[%s189 + $0x30] sm:$0xff] %v917
        %982 = vst [vmem:[%s189 + $0x38] sm:$0xff] %v918
        %983 = vst [vmem:[%s189 + $0x40] sm:$0xff] %v919
        %984 = vst [vmem:[%s189 + $0x48] sm:$0xff] %v920
        %985 = vst [vmem:[%s189 + $0x50] sm:$0xff] %v921
        %986 = vst [vmem:[%s189 + $0x58] sm:$0xff] %v922
        %987 = vst [vmem:[%s189 + $0x60] sm:$0xff] %v923
        %988 = vst [vmem:[%s189 + $0x68] sm:$0xff] %v924
        %989 = vst [vmem:[%s189 + $0x70] sm:$0xff] %v925
        %990 = vst [vmem:[%s189 + $0x78] sm:$0xff] %v926
        %991 = vst [vmem:[%s189 + $0x80] sm:$0xff] %v927
        %992 = vst [vmem:[%s189 + $0x88] sm:$0xff] %v928
        %993 = vst [vmem:[%s189 + $0x90] sm:$0xff] %v929
        %994 = vst [vmem:[%s189 + $0x98] sm:$0xff] %v930
        %995 = vst [vmem:[%s189 + $0xa0] sm:$0xff] %v931
        %996 = vst [vmem:[%s189 + $0xa8] sm:$0xff] %v932
        %997 = vst [vmem:[%s189 + $0xb0] sm:$0xff] %v933
        %998 = vst [vmem:[%s189 + $0xb8] sm:$0xff] %v934
        %999 = vst [vmem:[%s189 + $0xc0] sm:$0xff] %v935
        %1000 = vst [vmem:[%s189 + $0xc8] sm:$0xff] %v936
        %1001 = vst [vmem:[%s189 + $0xd0] sm:$0xff] %v937
        %1002 = vst [vmem:[%s189 + $0xd8] sm:$0xff] %v938
        %1003 = vst [vmem:[%s189 + $0xe0] sm:$0xff] %v939
        %1004 = vst [vmem:[%s189 + $0xe8] sm:$0xff] %v940
        %1005 = vst [vmem:[%s189 + $0xf0] sm:$0xff] %v941
        %1006 = vst [vmem:[%s189 + $0xf8] sm:$0xff] %v942
        %1007 = vst [vmem:[%s189 + $0x100] sm:$0xff] %v943
        %1008 = vst [vmem:[%s189 + $0x108] sm:$0xff] %v944
        %1009 = vst [vmem:[%s189 + $0x110] sm:$0xff] %v945
        %1010 = vst [vmem:[%s189 + $0x118] sm:$0xff] %v946
        %1011 = vst [vmem:[%s189 + $0x120] sm:$0xff] %v947
        %1012 = vst [vmem:[%s189 + $0x128] sm:$0xff] %v948
        %1013 = vst [vmem:[%s189 + $0x130] sm:$0xff] %v949
        %1014 = vst [vmem:[%s189 + $0x138] sm:$0xff] %v950
        %1015 = vst [vmem:[%s189 + $0x140] sm:$0xff] %v951
        %1016 = vst [vmem:[%s189 + $0x148] sm:$0xff] %v952
        %1017 = vst [vmem:[%s189 + $0x150] sm:$0xff] %v953
        %1018 = vst [vmem:[%s189 + $0x158] sm:$0xff] %v954
        %1019 = vst [vmem:[%s189 + $0x160] sm:$0xff] %v955
        %1020 = vst [vmem:[%s189 + $0x168] sm:$0xff] %v956
        %1021 = vst [vmem:[%s189 + $0x170] sm:$0xff] %v957
        %1022 = vst [vmem:[%s189 + $0x178] sm:$0xff] %v958
        %1023 = vst [vmem:[%s189 + $0x180] sm:$0xff] %v959
        %1024 = vst [vmem:[%s189 + $0x188] sm:$0xff] %v960
        %1025 = vst [vmem:[%s189 + $0x190] sm:$0xff] %v961
        %1026 = vst [vmem:[%s189 + $0x198] sm:$0xff] %v962
        %1027 = vst [vmem:[%s189 + $0x1a0] sm:$0xff] %v963
        %1028 = vst [vmem:[%s189 + $0x1a8] sm:$0xff] %v964
        %1029 = vst [vmem:[%s189 + $0x1b0] sm:$0xff] %v965
        %1030 = vst [vmem:[%s189 + $0x1b8] sm:$0xff] %v966
        %1031 = vst [vmem:[%s189 + $0x1c0] sm:$0xff] %v967
        %1032 = vst [vmem:[%s189 + $0x1c8] sm:$0xff] %v968
        %1033 = vst [vmem:[%s189 + $0x1d0] sm:$0xff] %v969
        %1034 = vst [vmem:[%s189 + $0x1d8] sm:$0xff] %v970
        %1035 = vst [vmem:[%s189 + $0x1e0] sm:$0xff] %v971
        %1036 = vst [vmem:[%s189 + $0x1e8] sm:$0xff] %v972
        %1037 = vst [vmem:[%s189 + $0x1f0] sm:$0xff] %v973
        %1038 = vst [vmem:[%s189 + $0x1f8] sm:$0xff] %v974
        %s1039 = sand.u32 %s96, 1
        %s1040 = scalar_lea.sflag [#allocation4], %s1039
        %s1041 = sand.u32 %s96, 1
        %s1042 = smul.addr %s1041, 512
        %s1043 = scalar_lea.vmem [#allocation5], %s1042
        // Predicated region
        $region37: #{tpu_custom_call.1} parent=31 // pred_check
          %p1044 = pneg %p106
        $region38: #{tpu_custom_call.1} parent=31 // pred_check_branch
          %1046 = sbr.rel (%p1044) target = $region40
        $region39: #{tpu_custom_call.1} parent=31 // pred_region
          %s1047 = smul.u32 2, %s20
          %s1049 = ssub.s32 8192, 8192
          %1050 = vsyncadd %s1040, %s1049
          %s1051 = smul.addr %s1047, 32
          %s1052 = smul.addr %s1051, 128
          %s1053 = scalar_lea.hbm %s3, %s1052
          %s1054 = sshll.u32 %s1043, 4
          %s1055 = int_to_ptr.vmem [resolvable:$true] %s1054
          %1060 = dma.vmem_to_hbm [thread:$0]  %s1055, 8192, %s1053, %s1040, 256, 256, 16
        $region40: #{tpu_custom_call.1} parent=31 // pred_fallthru
          _
      $region32: #{tpu_custom_call.1} parent=5 // pred_fallthru
        _
      %p1061 = scmp.le.s32.totalorder 2, %s15
      // Predicated region
      $region41: #{tpu_custom_call.1} parent=5 // pred_check
        %p1062 = pneg %p1061
      $region42: #{tpu_custom_call.1} parent=5 // pred_check_branch
        %1064 = sbr.rel (%p1062) target = $region44
      $region43: #{tpu_custom_call.1} parent=5 // pred_region
        %s1065 = ssub.s32 %s15, 2
        // Predicated region
        $region45: #{tpu_custom_call.1} parent=43 // pred_check
          %p1066 = pneg %p112
        $region46: #{tpu_custom_call.1} parent=43 // pred_check_branch
          %1068 = sbr.rel (%p1066) target = $region48
        $region47: #{tpu_custom_call.1} parent=43 // pred_region
          %s1069 = sand.u32 %s97, 1
          %s1070 = scalar_lea.sflag [#allocation4], %s1069
          %s1071 = sand.u32 %s97, 1
          %s1072 = smul.addr %s1071, 512
          %s1073 = scalar_lea.vmem [#allocation5], %s1072
          %1074 = dma.done %s1070, 8192
        $region48: #{tpu_custom_call.1} parent=43 // pred_fallthru
          _
      $region44: #{tpu_custom_call.1} parent=5 // pred_fallthru
        _
    $region6: #{tpu_custom_call.1} parent=1 // loop_footer
      %s19 = sadd.s32 1, %s15
    $region7: #{tpu_custom_call.1} parent=1 // loop_footer_branch
      %14 = sbr.rel target = $region3
    $region8: #{tpu_custom_call.1} parent=1 // loop_exit
      _
    %1075 = vsyncpa [#allocation3], 1
    %s1076 = scalar_lea.sflag [#allocation3], 1
    %1077 = vsyncpa %s1076, 1
    %1078 = vsyncpa [#allocation4], 1
    %s1079 = scalar_lea.sflag [#allocation4], 1
    %1080 = vsyncpa %s1079, 1

</llo_original>
